<compile_context>
chip_gen: v7x
topology: tpu7x:2x2x1
jax: 0.10.0
libtpu: 0.0.40
codegen_flags: <defaults>
</compile_context>

<pallas_src>
import functools

import jax
import jax.numpy as jnp
from jax import lax
from jax.experimental import pallas as pl
from jax.experimental.pallas import tpu as pltpu

# PyTorch conv2d is cross-correlation, so taps are applied un-flipped.
_SOBEL_X = ((-1.0, 0.0, 1.0), (-2.0, 0.0, 2.0), (-1.0, 0.0, 1.0))
_SOBEL_Y = ((1.0, 2.0, 1.0), (0.0, 0.0, 0.0), (-1.0, -2.0, -1.0))


def _shifted_cols(x):
    """Zero-padded column (lane) shifts: returns (x[..., j+1], x[..., j-1])."""
    z = jnp.zeros_like(x[..., :1])
    left = jnp.concatenate([x[..., 1:], z], axis=-1)    # x[..., j+1]
    right = jnp.concatenate([z, x[..., :-1]], axis=-1)  # x[..., j-1]
    return left, right


def _sobel_edges_stripe(padded, th):
    """padded: (TB, TH+2, W) row-padded stripe -> (TB, TH, W) edge magnitude.

    Separable Sobel:
      sobel_x = outer([1,2,1], [-1,0,1]);  sobel_y = outer([1,0,-1], [1,2,1])
    """
    left, right = _shifted_cols(padded)
    d = left - right                      # horizontal [-1, 0, 1]
    s = left + 2.0 * padded + right       # horizontal [ 1, 2, 1]
    ex = d[:, 0:th, :] + 2.0 * d[:, 1:th + 1, :] + d[:, 2:th + 2, :]
    ey = s[:, 0:th, :] - s[:, 2:th + 2, :]
    return jnp.sqrt(ex * ex + ey * ey)


def _edge_loss_kernel(g_ref, g_halo_ref, t_ref, t_halo_ref, out_ref,
                      *, n_items, n_rows, mask_rows, mask_items):
    # g_ref/t_ref:           (TB, TH, W) row stripes of TB batch items
    # g_halo_ref/t_halo_ref: (TB, 1, 2, W) rows just above/below the stripe
    #                        (already zero at the true image border)
    # out_ref:               (1, 1, 1, 1) partial |edge_g - edge_t| sum
    g = g_ref[...].astype(jnp.float32)
    t = t_ref[...].astype(jnp.float32)
    g_halo = g_halo_ref[...].astype(jnp.float32)
    t_halo = t_halo_ref[...].astype(jnp.float32)

    tb, th, w = g.shape
    zero = jnp.zeros((), jnp.float32)

    # Validity mask is only materialized when the tiling does not divide the
    # problem evenly (trace-time specialization -> zero mask cost otherwise).
    valid = None
    if mask_rows or mask_items:
        ok = jnp.ones((tb, th, w), dtype=jnp.bool_)
        if mask_rows:
            r = pl.program_id(1)
            row_ids = lax.broadcasted_iota(jnp.int32, (tb, th, w), 1) + r * th
            ok = ok & (row_ids < n_rows)
        if mask_items:
            b = pl.program_id(0)
            item_ids = lax.broadcasted_iota(jnp.int32, (tb, th, w), 0) + b * tb
            ok = ok & (item_ids < n_items)
        valid = ok
        # Zero invalid rows/items so valid neighbors see correct zero padding.
        g = jnp.where(valid, g, zero)
        t = jnp.where(valid, t, zero)

    g_pad = jnp.concatenate([g_halo[:, 0, 0:1, :], g, g_halo[:, 0, 1:2, :]],
                            axis=1)                      # (TB, TH+2, W)
    t_pad = jnp.concatenate([t_halo[:, 0, 0:1, :], t, t_halo[:, 0, 1:2, :]],
                            axis=1)

    e_g = _sobel_edges_stripe(g_pad, th)
    e_t = _sobel_edges_stripe(t_pad, th)

    diff = jnp.abs(e_g - e_t)
    if valid is not None:
        diff = jnp.where(valid, diff, zero)
    out_ref[...] = jnp.reshape(jnp.sum(diff), (1, 1, 1, 1))


def edge_loss(generated, target, *, target_stripe_bytes=1 << 20):
    """EdgeLoss.forward: L1(sobel_edges(generated), sobel_edges(target))."""
    n, c, h, w = generated.shape
    assert c == 1, "SobelFilter weights are (1,1,3,3) -> single channel input"
    assert target.shape == generated.shape

    gen = generated.reshape(n, h, w)
    tgt = target.reshape(n, h, w)

    # --- choose tile sizes (kept well under v7x's 64 MiB VMEM with 2 tensors
    #     x 2 pipeline buffers x stripe, plus f32 temporaries) ---------------
    row_bytes = w * 4  # f32 compute width
    if h * row_bytes <= target_stripe_bytes:
        th = h                                        # whole image per stripe
        tb = int(max(1, min(n, target_stripe_bytes // (h * row_bytes))))
    else:
        th = int(max(8, ((target_stripe_bytes // row_bytes) // 8) * 8))
        tb = 1
    nb = pl.cdiv(n, tb)
    rr = pl.cdiv(h, th)

    mask_rows = (h % th) != 0
    mask_items = (n % tb) != 0

    # --- halo rows (2 rows per stripe per image; negligible HBM) ------------
    if rr == 1:
        # Single stripe covers the whole image -> halos are the zero border
        # rows; skip the HBM gather pass entirely.
        gen_halo = jnp.zeros((n, 1, 2, w), gen.dtype)
        tgt_halo = gen_halo
    else:
        starts = jnp.arange(rr, dtype=jnp.int32) * th

        def build_halo(img):
            def grab(idx):
                rows = jnp.take(img, jnp.clip(idx, 0, h - 1), axis=1)  # (N,R,W)
                ok = ((idx >= 0) & (idx < h))[None, :, None]
                return jnp.where(ok, rows, jnp.zeros((), img.dtype))
            return jnp.stack([grab(starts - 1), grab(starts + th)], axis=2)

        gen_halo = build_halo(gen)   # (N, R, 2, W)
        tgt_halo = build_halo(tgt)

    kernel = functools.partial(_edge_loss_kernel, n_items=n, n_rows=h,
                               mask_rows=mask_rows, mask_items=mask_items)

    partials = pl.pallas_call(
        kernel,
        out_shape=jax.ShapeDtypeStruct((nb, rr, 1, 1), jnp.float32),
        grid=(nb, rr),
        in_specs=[
            pl.BlockSpec((tb, th, w), lambda b, r: (b, r, 0)),
            pl.BlockSpec((tb, 1, 2, w), lambda b, r: (b, r, 0, 0)),
            pl.BlockSpec((tb, th, w), lambda b, r: (b, r, 0)),
            pl.BlockSpec((tb, 1, 2, w), lambda b, r: (b, r, 0, 0)),
        ],
        out_specs=pl.BlockSpec((1, 1, 1, 1), lambda b, r: (b, r, 0, 0)),
        compiler_params=pltpu.CompilerParams(
            dimension_semantics=("parallel", "parallel")),
    )(gen, gen_halo, tgt, tgt_halo)

    # nn.L1Loss default reduction='mean' over all N*1*H*W edge-map elements.
    return jnp.sum(partials) / (n * c * h * w)


def _edge_loss_ref(generated, target):
    """Pure-JAX reference (explicit shifts; no MXU conv precision issues)."""
    def edges(img4):
        x = img4[:, 0].astype(jnp.float32)
        hh, ww = x.shape[1], x.shape[2]
        p = jnp.pad(x, ((0, 0), (1, 1), (1, 1)))

        def cc(wts):
            acc = jnp.zeros_like(x)
            for di in range(3):
                for dj in range(3):
                    cval = wts[di][dj]
                    if cval != 0.0:
                        acc = acc + cval * p[:, di:di + hh, dj:dj + ww]
            return acc

        ex = cc(_SOBEL_X)
        ey = cc(_SOBEL_Y)
        return jnp.sqrt(ex * ex + ey * ey)

    return jnp.mean(jnp.abs(edges(generated) - edges(target)))


if __name__ == "__main__":
    key = jax.random.PRNGKey(0)
    k1, k2, k3, k4 = jax.random.split(key, 4)

    # Main small-shape case (single stripe per image, no masking).
    gen = jax.random.normal(k1, (2, 1, 16, 16), dtype=jnp.float32)
    tgt = jax.random.normal(k2, (2, 1, 16, 16), dtype=jnp.float32)
    loss = edge_loss(gen, tgt)
    jax.block_until_ready(loss)
    ref = _edge_loss_ref(gen, tgt)
    assert jnp.allclose(loss, ref, rtol=1e-5, atol=1e-5), (loss, ref)

    # Exercise the striped/halo path + partial-last-stripe masking by forcing
    # a tiny stripe budget (h=20 not divisible by th=8).
    gen2 = jax.random.normal(k3, (2, 1, 20, 16), dtype=jnp.float32)
    tgt2 = jax.random.normal(k4, (2, 1, 20, 16), dtype=jnp.float32)
    loss2 = edge_loss(gen2, tgt2, target_stripe_bytes=512)
    jax.block_until_ready(loss2)
    ref2 = _edge_loss_ref(gen2, tgt2)
    assert jnp.allclose(loss2, ref2, rtol=1e-5, atol=1e-5), (loss2, ref2)

    print("KERNEL_OK")
</pallas_src>

<mosaic_0001>
module attributes {stable_mosaic.version = 11 : i64} {
  func.func @_edge_loss_kernel(%arg0: i32, %arg1: i32, %arg2: memref<2x16x16xf32, #tpu.memory_space<vmem>>, %arg3: memref<2x1x2x16xf32, #tpu.memory_space<vmem>>, %arg4: memref<2x16x16xf32, #tpu.memory_space<vmem>>, %arg5: memref<2x1x2x16xf32, #tpu.memory_space<vmem>>, %arg6: memref<1x1x1x1xf32, #tpu.memory_space<vmem>>) attributes {dimension_semantics = [#tpu.dimension_semantics<parallel>, #tpu.dimension_semantics<parallel>], iteration_bounds = array<i64: 1, 1>, scalar_prefetch = 0 : i64, scratch_operands = 0 : i64, tpu.core_type = #tpu.core_type<tc>, window_params = [{transform_indices = @transform_0, window_bounds = array<i64: 2, 16, 16>}, {transform_indices = @transform_1, window_bounds = array<i64: 2, 1, 2, 16>}, {transform_indices = @transform_2, window_bounds = array<i64: 2, 16, 16>}, {transform_indices = @transform_3, window_bounds = array<i64: 2, 1, 2, 16>}, {transform_indices = @transform_4, window_bounds = array<i64: 1, 1, 1, 1>}]} {
    %c0 = arith.constant 0 : index
    %c0_0 = arith.constant 0 : index
    %c0_1 = arith.constant 0 : index
    %0 = vector.load %arg2[%c0, %c0_0, %c0_1] : memref<2x16x16xf32, #tpu.memory_space<vmem>>, vector<2x16x16xf32>
    %c0_2 = arith.constant 0 : index
    %c0_3 = arith.constant 0 : index
    %c0_4 = arith.constant 0 : index
    %1 = vector.load %arg4[%c0_2, %c0_3, %c0_4] : memref<2x16x16xf32, #tpu.memory_space<vmem>>, vector<2x16x16xf32>
    %c0_5 = arith.constant 0 : index
    %c0_6 = arith.constant 0 : index
    %c0_7 = arith.constant 0 : index
    %c0_8 = arith.constant 0 : index
    %2 = vector.load %arg3[%c0_5, %c0_6, %c0_7, %c0_8] : memref<2x1x2x16xf32, #tpu.memory_space<vmem>>, vector<2x1x2x16xf32>
    %c0_9 = arith.constant 0 : index
    %c0_10 = arith.constant 0 : index
    %c0_11 = arith.constant 0 : index
    %c0_12 = arith.constant 0 : index
    %3 = vector.load %arg5[%c0_9, %c0_10, %c0_11, %c0_12] : memref<2x1x2x16xf32, #tpu.memory_space<vmem>>, vector<2x1x2x16xf32>
    %4 = vector.extract_strided_slice %2 {offsets = [0, 0, 0, 0], sizes = [2, 1, 1, 16], strides = [1, 1, 1, 1]} : vector<2x1x2x16xf32> to vector<2x1x1x16xf32>
    %5 = vector.shape_cast %4 : vector<2x1x1x16xf32> to vector<2x1x16xf32>
    %6 = vector.extract_strided_slice %2 {offsets = [0, 0, 1, 0], sizes = [2, 1, 1, 16], strides = [1, 1, 1, 1]} : vector<2x1x2x16xf32> to vector<2x1x1x16xf32>
    %7 = vector.shape_cast %6 : vector<2x1x1x16xf32> to vector<2x1x16xf32>
    %8 = tpu.concatenate %5, %0, %7 in 1 : vector<2x1x16xf32>, vector<2x16x16xf32>, vector<2x1x16xf32> -> vector<2x18x16xf32>
    %9 = vector.extract_strided_slice %3 {offsets = [0, 0, 0, 0], sizes = [2, 1, 1, 16], strides = [1, 1, 1, 1]} : vector<2x1x2x16xf32> to vector<2x1x1x16xf32>
    %10 = vector.shape_cast %9 : vector<2x1x1x16xf32> to vector<2x1x16xf32>
    %11 = vector.extract_strided_slice %3 {offsets = [0, 0, 1, 0], sizes = [2, 1, 1, 16], strides = [1, 1, 1, 1]} : vector<2x1x2x16xf32> to vector<2x1x1x16xf32>
    %12 = vector.shape_cast %11 : vector<2x1x1x16xf32> to vector<2x1x16xf32>
    %13 = tpu.concatenate %10, %1, %12 in 1 : vector<2x1x16xf32>, vector<2x16x16xf32>, vector<2x1x16xf32> -> vector<2x18x16xf32>
    %cst = arith.constant 0.000000e+00 : f32
    %14 = vector.broadcast %cst : f32 to vector<2x18x1xf32>
    %15 = vector.extract_strided_slice %8 {offsets = [0, 0, 1], sizes = [2, 18, 15], strides = [1, 1, 1]} : vector<2x18x16xf32> to vector<2x18x15xf32>
    %16 = tpu.concatenate %15, %14 in 2 : vector<2x18x15xf32>, vector<2x18x1xf32> -> vector<2x18x16xf32>
    %17 = vector.extract_strided_slice %8 {offsets = [0, 0, 0], sizes = [2, 18, 15], strides = [1, 1, 1]} : vector<2x18x16xf32> to vector<2x18x15xf32>
    %18 = tpu.concatenate %14, %17 in 2 : vector<2x18x1xf32>, vector<2x18x15xf32> -> vector<2x18x16xf32>
    %19 = arith.subf %16, %18 : vector<2x18x16xf32>
    %cst_13 = arith.constant 2.000000e+00 : f32
    %20 = vector.broadcast %cst_13 : f32 to vector<2x18x16xf32>
    %21 = arith.mulf %20, %8 : vector<2x18x16xf32>
    %22 = arith.addf %16, %21 : vector<2x18x16xf32>
    %23 = arith.addf %22, %18 : vector<2x18x16xf32>
    %24 = vector.extract_strided_slice %19 {offsets = [0, 0, 0], sizes = [2, 16, 16], strides = [1, 1, 1]} : vector<2x18x16xf32> to vector<2x16x16xf32>
    %25 = vector.extract_strided_slice %19 {offsets = [0, 1, 0], sizes = [2, 16, 16], strides = [1, 1, 1]} : vector<2x18x16xf32> to vector<2x16x16xf32>
    %cst_14 = arith.constant 2.000000e+00 : f32
    %26 = vector.broadcast %cst_14 : f32 to vector<2x16x16xf32>
    %27 = arith.mulf %26, %25 : vector<2x16x16xf32>
    %28 = arith.addf %24, %27 : vector<2x16x16xf32>
    %29 = vector.extract_strided_slice %19 {offsets = [0, 2, 0], sizes = [2, 16, 16], strides = [1, 1, 1]} : vector<2x18x16xf32> to vector<2x16x16xf32>
    %30 = arith.addf %28, %29 : vector<2x16x16xf32>
    %31 = vector.extract_strided_slice %23 {offsets = [0, 0, 0], sizes = [2, 16, 16], strides = [1, 1, 1]} : vector<2x18x16xf32> to vector<2x16x16xf32>
    %32 = vector.extract_strided_slice %23 {offsets = [0, 2, 0], sizes = [2, 16, 16], strides = [1, 1, 1]} : vector<2x18x16xf32> to vector<2x16x16xf32>
    %33 = arith.subf %31, %32 : vector<2x16x16xf32>
    %34 = arith.mulf %30, %30 : vector<2x16x16xf32>
    %35 = arith.mulf %33, %33 : vector<2x16x16xf32>
    %36 = arith.addf %34, %35 : vector<2x16x16xf32>
    %37 = math.sqrt %36 : vector<2x16x16xf32>
    %cst_15 = arith.constant 0.000000e+00 : f32
    %38 = vector.broadcast %cst_15 : f32 to vector<2x18x1xf32>
    %39 = vector.extract_strided_slice %13 {offsets = [0, 0, 1], sizes = [2, 18, 15], strides = [1, 1, 1]} : vector<2x18x16xf32> to vector<2x18x15xf32>
    %40 = tpu.concatenate %39, %38 in 2 : vector<2x18x15xf32>, vector<2x18x1xf32> -> vector<2x18x16xf32>
    %41 = vector.extract_strided_slice %13 {offsets = [0, 0, 0], sizes = [2, 18, 15], strides = [1, 1, 1]} : vector<2x18x16xf32> to vector<2x18x15xf32>
    %42 = tpu.concatenate %38, %41 in 2 : vector<2x18x1xf32>, vector<2x18x15xf32> -> vector<2x18x16xf32>
    %43 = arith.subf %40, %42 : vector<2x18x16xf32>
    %cst_16 = arith.constant 2.000000e+00 : f32
    %44 = vector.broadcast %cst_16 : f32 to vector<2x18x16xf32>
    %45 = arith.mulf %44, %13 : vector<2x18x16xf32>
    %46 = arith.addf %40, %45 : vector<2x18x16xf32>
    %47 = arith.addf %46, %42 : vector<2x18x16xf32>
    %48 = vector.extract_strided_slice %43 {offsets = [0, 0, 0], sizes = [2, 16, 16], strides = [1, 1, 1]} : vector<2x18x16xf32> to vector<2x16x16xf32>
    %49 = vector.extract_strided_slice %43 {offsets = [0, 1, 0], sizes = [2, 16, 16], strides = [1, 1, 1]} : vector<2x18x16xf32> to vector<2x16x16xf32>
    %cst_17 = arith.constant 2.000000e+00 : f32
    %50 = vector.broadcast %cst_17 : f32 to vector<2x16x16xf32>
    %51 = arith.mulf %50, %49 : vector<2x16x16xf32>
    %52 = arith.addf %48, %51 : vector<2x16x16xf32>
    %53 = vector.extract_strided_slice %43 {offsets = [0, 2, 0], sizes = [2, 16, 16], strides = [1, 1, 1]} : vector<2x18x16xf32> to vector<2x16x16xf32>
    %54 = arith.addf %52, %53 : vector<2x16x16xf32>
    %55 = vector.extract_strided_slice %47 {offsets = [0, 0, 0], sizes = [2, 16, 16], strides = [1, 1, 1]} : vector<2x18x16xf32> to vector<2x16x16xf32>
    %56 = vector.extract_strided_slice %47 {offsets = [0, 2, 0], sizes = [2, 16, 16], strides = [1, 1, 1]} : vector<2x18x16xf32> to vector<2x16x16xf32>
    %57 = arith.subf %55, %56 : vector<2x16x16xf32>
    %58 = arith.mulf %54, %54 : vector<2x16x16xf32>
    %59 = arith.mulf %57, %57 : vector<2x16x16xf32>
    %60 = arith.addf %58, %59 : vector<2x16x16xf32>
    %61 = math.sqrt %60 : vector<2x16x16xf32>
    %62 = arith.subf %37, %61 : vector<2x16x16xf32>
    %63 = math.absf %62 : vector<2x16x16xf32>
    %64 = vector.shape_cast %63 : vector<2x16x16xf32> to vector<1x2x16x16xf32>
    %cst_18 = arith.constant dense<0.000000e+00> : vector<1xf32>
    %65 = vector.multi_reduction <add>, %64, %cst_18 [1, 2, 3] : vector<1x2x16x16xf32> to vector<1xf32>
    %66 = vector.shape_cast %65 : vector<1xf32> to vector<1x1x1x1xf32>
    %67 = vector.extract %66[0, 0, 0, 0] : f32 from vector<1x1x1x1xf32>
    %68 = vector.broadcast %67 : f32 to vector<1x1x1x1xf32>
    %c0_19 = arith.constant 0 : index
    %c0_20 = arith.constant 0 : index
    %c0_21 = arith.constant 0 : index
    %c0_22 = arith.constant 0 : index
    %69 = vector.load %arg6[%c0_19, %c0_20, %c0_21, %c0_22] : memref<1x1x1x1xf32, #tpu.memory_space<vmem>>, vector<1x1x1x1xf32>
    tpu.vector_store %arg6[%c0_19, %c0_20, %c0_21, %c0_22], %68 {strides = array<i32>} : memref<1x1x1x1xf32, #tpu.memory_space<vmem>>, vector<1x1x1x1xf32>,
    return
  }
  func.func @transform_0(%arg0: i32, %arg1: i32) -> (i32, i32, i32) {
    %c0_i32 = arith.constant 0 : i32
    %c0_i32_0 = arith.constant 0 : i32
    return %arg0, %arg1, %c0_i32 : i32, i32, i32
  }
  func.func @transform_1(%arg0: i32, %arg1: i32) -> (i32, i32, i32, i32) {
    %c0_i32 = arith.constant 0 : i32
    %c0_i32_0 = arith.constant 0 : i32
    %c0_i32_1 = arith.constant 0 : i32
    return %arg0, %arg1, %c0_i32, %c0_i32_0 : i32, i32, i32, i32
  }
  func.func @transform_2(%arg0: i32, %arg1: i32) -> (i32, i32, i32) {
    %c0_i32 = arith.constant 0 : i32
    %c0_i32_0 = arith.constant 0 : i32
    return %arg0, %arg1, %c0_i32 : i32, i32, i32
  }
  func.func @transform_3(%arg0: i32, %arg1: i32) -> (i32, i32, i32, i32) {
    %c0_i32 = arith.constant 0 : i32
    %c0_i32_0 = arith.constant 0 : i32
    %c0_i32_1 = arith.constant 0 : i32
    return %arg0, %arg1, %c0_i32, %c0_i32_0 : i32, i32, i32, i32
  }
  func.func @transform_4(%arg0: i32, %arg1: i32) -> (i32, i32, i32, i32) {
    %c0_i32 = arith.constant 0 : i32
    %c0_i32_0 = arith.constant 0 : i32
    %c0_i32_1 = arith.constant 0 : i32
    return %arg0, %arg1, %c0_i32, %c0_i32_0 : i32, i32, i32, i32
  }
}

</mosaic_0001>

<llo_original>
// kernel: tpu_custom_call.1
$region0: #{tpu_custom_call.1}
  #allocation0 [shape = 'u32[]', space=smem, size = 0x4, offset = 0x4, fixed_abs, tag = 'smem constant byte address 0x4 - core index']
  #allocation1 [shape = 'u32[144,128]{1,0:T(1,128)}', space=vmem, size = 0x12000, scoped, tag = 'internal scratch']
  %s0 = inlined_call_operand.hbm [shape: f32[2,16,16], index: 0, kind: input, shape index: {}]
  %s1 = inlined_call_operand.hbm [shape: f32[2,1,2,16], index: 1, kind: input, shape index: {}]
  %s2 = inlined_call_operand.hbm [shape: f32[2,16,16], index: 2, kind: input, shape index: {}]
  %s3 = inlined_call_operand.vmem [shape: f32[2,1,2,16], index: 3, kind: input, shape index: {}]
  %s4 = inlined_call_operand.hbm [shape: f32[1,1,1,1], index: 4, kind: output, shape index: {}]
  %s5 = sld [smem:[#allocation0]]
  $region38: #{tpu_custom_call.1} parent=0
    _
  %s7 = ssub.s32 1, %s5
  %s8 = scalar_select 0, %s7, %s5
  $region1: #{tpu_custom_call.1} parent=0
    #allocation2 [shape = 'u8[16384]{0}', space=vmem, size = 0x4000, scoped, tag = 'input window, operand 0, single buffered']
    #allocation3 [shape = 's32[1]{0}', space=sflag, size = 0x4, scoped, tag = 'scoped memory for tpu_custom_call.1']
    #allocation4 [shape = 's32[1]{0}', space=sflag, size = 0x4, scoped, tag = 'scoped memory for tpu_custom_call.1']
    #allocation5 [shape = 'u8[2048]{0}', space=vmem, size = 0x800, scoped, tag = 'input window, operand 1, single buffered']
    #allocation6 [shape = 's32[1]{0}', space=sflag, size = 0x4, scoped, tag = 'scoped memory for tpu_custom_call.1']
    #allocation7 [shape = 'u8[16384]{0}', space=vmem, size = 0x4000, scoped, tag = 'input window, operand 2, single buffered']
    #allocation8 [shape = 'u8[512]{0}', space=vmem, size = 0x400, scoped, tag = 'output window, operand 0, single buffered']
    %9 = vsyncpa [#allocation3], 0
    %10 = vsyncpa [#allocation6], 0
    %11 = vsyncpa [#allocation4], 0
    // Predicated region
    $region2: #{tpu_custom_call.1} parent=1 // pred_check
      _
    $region3: #{tpu_custom_call.1} parent=1 // pred_check_branch
      %13 = sbr.rel (0) target = $region5
    $region4: #{tpu_custom_call.1} parent=1 // pred_region
      %s15 = ssub.s32 512, 512
      %16 = vsyncadd [#allocation3], %s15
      %s17 = sshll.u32 [#allocation2], 4
      %s18 = int_to_ptr.vmem [resolvable:$true] %s17
      %23 = dma.hbm_to_vmem [thread:$0]  %s0, 512, %s18, [#allocation3], 128, 128, 8
    $region5: #{tpu_custom_call.1} parent=1 // pred_fallthru
      _
    // Predicated region
    $region6: #{tpu_custom_call.1} parent=1 // pred_check
      _
    $region7: #{tpu_custom_call.1} parent=1 // pred_check_branch
      %25 = sbr.rel (0) target = $region9
    $region8: #{tpu_custom_call.1} parent=1 // pred_region
      %s27 = ssub.s32 64, 64
      %28 = vsyncadd [#allocation6], %s27
      %s29 = sshll.u32 [#allocation5], 4
      %s30 = int_to_ptr.vmem [resolvable:$true] %s29
      %35 = dma.hbm_to_vmem [thread:$0]  %s1, 64, %s30, [#allocation6], 32, 32, 2
    $region9: #{tpu_custom_call.1} parent=1 // pred_fallthru
      _
    // Predicated region
    $region10: #{tpu_custom_call.1} parent=1 // pred_check
      _
    $region11: #{tpu_custom_call.1} parent=1 // pred_check_branch
      %37 = sbr.rel (0) target = $region13
    $region12: #{tpu_custom_call.1} parent=1 // pred_region
      %s39 = ssub.s32 512, 512
      %40 = vsyncadd [#allocation6], %s39
      %s41 = sshll.u32 [#allocation7], 4
      %s42 = int_to_ptr.vmem [resolvable:$true] %s41
      %47 = dma.hbm_to_vmem [thread:$0]  %s2, 512, %s42, [#allocation6], 128, 128, 8
    $region13: #{tpu_custom_call.1} parent=1 // pred_fallthru
      _
    // Predicated region
    $region14: #{tpu_custom_call.1} parent=1 // pred_check
      _
    $region15: #{tpu_custom_call.1} parent=1 // pred_check_branch
      %49 = sbr.rel (0) target = $region17
    $region16: #{tpu_custom_call.1} parent=1 // pred_region
      _
    $region17: #{tpu_custom_call.1} parent=1 // pred_fallthru
      _
    // Predicated region
    $region18: #{tpu_custom_call.1} parent=1 // pred_check
      _
    $region19: #{tpu_custom_call.1} parent=1 // pred_check_branch
      %51 = sbr.rel (0) target = $region21
    $region20: #{tpu_custom_call.1} parent=1 // pred_region
      %52 = dma.done [#allocation3], 512
    $region21: #{tpu_custom_call.1} parent=1 // pred_fallthru
      _
    // Predicated region
    $region22: #{tpu_custom_call.1} parent=1 // pred_check
      _
    $region23: #{tpu_custom_call.1} parent=1 // pred_check_branch
      %54 = sbr.rel (0) target = $region25
    $region24: #{tpu_custom_call.1} parent=1 // pred_region
      %55 = dma.done [#allocation6], 64
    $region25: #{tpu_custom_call.1} parent=1 // pred_fallthru
      _
    // Predicated region
    $region26: #{tpu_custom_call.1} parent=1 // pred_check
      _
    $region27: #{tpu_custom_call.1} parent=1 // pred_check_branch
      %57 = sbr.rel (0) target = $region29
    $region28: #{tpu_custom_call.1} parent=1 // pred_region
      %58 = dma.done [#allocation6], 512
    $region29: #{tpu_custom_call.1} parent=1 // pred_fallthru
      _
    %v59 = vld [vmem:[#allocation2] sm:$0xff]
    %v60 = vld [vmem:[#allocation2 + $0x8] sm:$0xff]
    %v61 = vld [vmem:[#allocation2 + $0x10] sm:$0xff]
    %v62 = vld [vmem:[#allocation2 + $0x18] sm:$0xff]
    %v63 = vld [vmem:[#allocation7] sm:$0xff]
    %v64 = vld [vmem:[#allocation7 + $0x8] sm:$0xff]
    %v65 = vld [vmem:[#allocation7 + $0x10] sm:$0xff]
    %v66 = vld [vmem:[#allocation7 + $0x18] sm:$0xff]
    %v67 = vld [vmem:[#allocation5] sm:$0x3]
    %v68 = vld [vmem:[#allocation5 + $0x2] sm:$0x3]
    %v69 = vld [vmem:[%s3] sm:$0x3]
    %v70 = vld [vmem:[%s3 + $0x2] sm:$0x3]
    %vm75 = vcmask 1040384
    %v76 = vrot.slane %v59, 7
    %v77 = vrot.slane %v60, 7
    %v78 = vsel %vm75, %v76, %v77
    %v79 = vrot.slane %v61, 7
    %v80 = vrot.slane %v62, 7
    %v81 = vsel %vm75, %v79, %v80
    %v88 = vsel %vm75, %v67, %v76
    %v89 = vsel %vm75, %v68, %v79
    %v90 = vsel %vm75, %v77, %v67
    %v91 = vsel %vm75, %v80, %v68
    %v96 = vrot.slane %v63, 7
    %v97 = vrot.slane %v64, 7
    %v98 = vsel %vm75, %v96, %v97
    %v99 = vrot.slane %v65, 7
    %v100 = vrot.slane %v66, 7
    %v101 = vsel %vm75, %v99, %v100
    %v108 = vsel %vm75, %v69, %v96
    %v109 = vsel %vm75, %v70, %v99
    %v110 = vsel %vm75, %v97, %v69
    %v111 = vsel %vm75, %v100, %v70
    %116 = vrot.lane.b32.xlu0 %v88, 127
    %v117 = vpop.permute.xlu0 %116
    %118 = vrot.lane.b32.xlu0 %v78, 127
    %v119 = vpop.permute.xlu0 %118
    %120 = vrot.lane.b32.xlu0 %v90, 127
    %v121 = vpop.permute.xlu0 %120
    %122 = vrot.lane.b32.xlu0 %v89, 127
    %v123 = vpop.permute.xlu0 %122
    %124 = vrot.lane.b32.xlu0 %v81, 127
    %v125 = vpop.permute.xlu0 %124
    %126 = vrot.lane.b32.xlu0 %v91, 127
    %v127 = vpop.permute.xlu0 %126
    %vm134 = vcmask 121856
    %v135 = vsel %vm134, %v117, 0.0
    %v136 = vsel %vm134, %v119, 0.0
    %v137 = vsel %vm134, %v121, 0.0
    %v138 = vsel %vm134, %v123, 0.0
    %v139 = vsel %vm134, %v125, 0.0
    %v140 = vsel %vm134, %v127, 0.0
    %141 = vrot.lane.b32.xlu0 %v88, 1
    %v142 = vpop.permute.xlu0 %141
    %143 = vrot.lane.b32.xlu0 %v78, 1
    %v144 = vpop.permute.xlu0 %143
    %145 = vrot.lane.b32.xlu0 %v90, 1
    %v146 = vpop.permute.xlu0 %145
    %147 = vrot.lane.b32.xlu0 %v89, 1
    %v148 = vpop.permute.xlu0 %147
    %149 = vrot.lane.b32.xlu0 %v81, 1
    %v150 = vpop.permute.xlu0 %149
    %151 = vrot.lane.b32.xlu0 %v91, 1
    %v152 = vpop.permute.xlu0 %151
    %vm159 = vcmask 7168
    %v160 = vsel %vm159, 0.0, %v142
    %v161 = vsel %vm159, 0.0, %v144
    %v162 = vsel %vm159, 0.0, %v146
    %v163 = vsel %vm159, 0.0, %v148
    %v164 = vsel %vm159, 0.0, %v150
    %v165 = vsel %vm159, 0.0, %v152
    %v166 = vsub.f32 %v135, %v160
    %v167 = vsub.f32 %v136, %v161
    %v168 = vsub.f32 %v137, %v162
    %v169 = vsub.f32 %v138, %v163
    %v170 = vsub.f32 %v139, %v164
    %v171 = vsub.f32 %v140, %v165
    %v172 = vmul.f32 %v88, 2.0
    %v173 = vmul.f32 %v78, 2.0
    %v174 = vmul.f32 %v90, 2.0
    %v175 = vmul.f32 %v89, 2.0
    %v176 = vmul.f32 %v81, 2.0
    %v177 = vmul.f32 %v91, 2.0
    %v178 = vadd.f32 %v135, %v172
    %v179 = vadd.f32 %v136, %v173
    %v180 = vadd.f32 %v137, %v174
    %v181 = vadd.f32 %v138, %v175
    %v182 = vadd.f32 %v139, %v176
    %v183 = vadd.f32 %v140, %v177
    %v184 = vadd.f32 %v178, %v160
    %v185 = vadd.f32 %v179, %v161
    %v186 = vadd.f32 %v180, %v162
    %v187 = vadd.f32 %v181, %v163
    %v188 = vadd.f32 %v182, %v164
    %v189 = vadd.f32 %v183, %v165
    %v190 = vmul.f32 %v166, 2.0
    %v191 = vmul.f32 %v167, 2.0
    %v192 = vmul.f32 %v168, 2.0
    %v193 = vmul.f32 %v169, 2.0
    %v194 = vmul.f32 %v170, 2.0
    %v195 = vmul.f32 %v171, 2.0
    %vm202 = vcmask 1046528
    %v203 = vrot.slane %v190, 1
    %v204 = vrot.slane %v191, 1
    %v205 = vsel %vm202, %v203, %v204
    %v206 = vrot.slane %v192, 1
    %v207 = vsel %vm202, %v204, %v206
    %v208 = vrot.slane %v193, 1
    %v209 = vrot.slane %v194, 1
    %v210 = vsel %vm202, %v208, %v209
    %v211 = vrot.slane %v195, 1
    %v212 = vsel %vm202, %v209, %v211
    %v217 = vadd.f32 %v166, %v205
    %v218 = vadd.f32 %v167, %v207
    %v219 = vadd.f32 %v169, %v210
    %v220 = vadd.f32 %v170, %v212
    %vm227 = vcmask 1045504
    %v228 = vrot.slane %v166, 2
    %v229 = vrot.slane %v167, 2
    %v230 = vsel %vm227, %v228, %v229
    %v231 = vrot.slane %v168, 2
    %v232 = vsel %vm227, %v229, %v231
    %v233 = vrot.slane %v169, 2
    %v234 = vrot.slane %v170, 2
    %v235 = vsel %vm227, %v233, %v234
    %v236 = vrot.slane %v171, 2
    %v237 = vsel %vm227, %v234, %v236
    %v242 = vadd.f32 %v217, %v230
    %v243 = vadd.f32 %v218, %v232
    %v244 = vadd.f32 %v219, %v235
    %v245 = vadd.f32 %v220, %v237
    %v252 = vrot.slane %v184, 2
    %v253 = vrot.slane %v185, 2
    %v254 = vsel %vm227, %v252, %v253
    %v255 = vrot.slane %v186, 2
    %v256 = vsel %vm227, %v253, %v255
    %v257 = vrot.slane %v187, 2
    %v258 = vrot.slane %v188, 2
    %v259 = vsel %vm227, %v257, %v258
    %v260 = vrot.slane %v189, 2
    %v261 = vsel %vm227, %v258, %v260
    %v266 = vsub.f32 %v184, %v254
    %v267 = vsub.f32 %v185, %v256
    %v268 = vsub.f32 %v187, %v259
    %v269 = vsub.f32 %v188, %v261
    %v270 = vmul.f32 %v242, %v242
    %v271 = vmul.f32 %v243, %v243
    %v272 = vmul.f32 %v244, %v244
    %v273 = vmul.f32 %v245, %v245
    %v274 = vmul.f32 %v266, %v266
    %v275 = vmul.f32 %v267, %v267
    %v276 = vmul.f32 %v268, %v268
    %v277 = vmul.f32 %v269, %v269
    %v278 = vadd.f32 %v270, %v274
    %v279 = vadd.f32 %v271, %v275
    %v280 = vadd.f32 %v272, %v276
    %v281 = vadd.f32 %v273, %v277
    %v282 = vrsqrt.pop %v278
    %v283 = vmul.f32 %v278, %v282
    %vm284 = vcmp.eq.f32.partialorder %v278, inf
    %v285 = vsel %vm284, %v278, %v283
    %vm286 = vcmp.eq.f32.partialorder %v278, 0.0
    %v287 = vand.u32 %v278, 2147483648
    %v288 = vsel %vm286, %v287, %v285
    %v289 = vrsqrt.pop %v279
    %v290 = vmul.f32 %v279, %v289
    %vm291 = vcmp.eq.f32.partialorder %v279, inf
    %v292 = vsel %vm291, %v279, %v290
    %vm293 = vcmp.eq.f32.partialorder %v279, 0.0
    %v294 = vand.u32 %v279, 2147483648
    %v295 = vsel %vm293, %v294, %v292
    %v296 = vrsqrt.pop %v280
    %v297 = vmul.f32 %v280, %v296
    %vm298 = vcmp.eq.f32.partialorder %v280, inf
    %v299 = vsel %vm298, %v280, %v297
    %vm300 = vcmp.eq.f32.partialorder %v280, 0.0
    %v301 = vand.u32 %v280, 2147483648
    %v302 = vsel %vm300, %v301, %v299
    %v303 = vrsqrt.pop %v281
    %v304 = vmul.f32 %v281, %v303
    %vm305 = vcmp.eq.f32.partialorder %v281, inf
    %v306 = vsel %vm305, %v281, %v304
    %vm307 = vcmp.eq.f32.partialorder %v281, 0.0
    %v308 = vand.u32 %v281, 2147483648
    %v309 = vsel %vm307, %v308, %v306
    %314 = vrot.lane.b32.xlu0 %v108, 127
    %v315 = vpop.permute.xlu0 %314
    %316 = vrot.lane.b32.xlu0 %v98, 127
    %v317 = vpop.permute.xlu0 %316
    %318 = vrot.lane.b32.xlu0 %v110, 127
    %v319 = vpop.permute.xlu0 %318
    %320 = vrot.lane.b32.xlu0 %v109, 127
    %v321 = vpop.permute.xlu0 %320
    %322 = vrot.lane.b32.xlu0 %v101, 127
    %v323 = vpop.permute.xlu0 %322
    %324 = vrot.lane.b32.xlu0 %v111, 127
    %v325 = vpop.permute.xlu0 %324
    %v332 = vsel %vm134, %v315, 0.0
    %v333 = vsel %vm134, %v317, 0.0
    %v334 = vsel %vm134, %v319, 0.0
    %v335 = vsel %vm134, %v321, 0.0
    %v336 = vsel %vm134, %v323, 0.0
    %v337 = vsel %vm134, %v325, 0.0
    %338 = vrot.lane.b32.xlu0 %v108, 1
    %v339 = vpop.permute.xlu0 %338
    %340 = vrot.lane.b32.xlu0 %v98, 1
    %v341 = vpop.permute.xlu0 %340
    %342 = vrot.lane.b32.xlu0 %v110, 1
    %v343 = vpop.permute.xlu0 %342
    %344 = vrot.lane.b32.xlu0 %v109, 1
    %v345 = vpop.permute.xlu0 %344
    %346 = vrot.lane.b32.xlu0 %v101, 1
    %v347 = vpop.permute.xlu0 %346
    %348 = vrot.lane.b32.xlu0 %v111, 1
    %v349 = vpop.permute.xlu0 %348
    %v356 = vsel %vm159, 0.0, %v339
    %v357 = vsel %vm159, 0.0, %v341
    %v358 = vsel %vm159, 0.0, %v343
    %v359 = vsel %vm159, 0.0, %v345
    %v360 = vsel %vm159, 0.0, %v347
    %v361 = vsel %vm159, 0.0, %v349
    %v362 = vsub.f32 %v332, %v356
    %v363 = vsub.f32 %v333, %v357
    %v364 = vsub.f32 %v334, %v358
    %v365 = vsub.f32 %v335, %v359
    %v366 = vsub.f32 %v336, %v360
    %v367 = vsub.f32 %v337, %v361
    %v368 = vmul.f32 %v108, 2.0
    %v369 = vmul.f32 %v98, 2.0
    %v370 = vmul.f32 %v110, 2.0
    %v371 = vmul.f32 %v109, 2.0
    %v372 = vmul.f32 %v101, 2.0
    %v373 = vmul.f32 %v111, 2.0
    %v374 = vadd.f32 %v332, %v368
    %v375 = vadd.f32 %v333, %v369
    %v376 = vadd.f32 %v334, %v370
    %v377 = vadd.f32 %v335, %v371
    %v378 = vadd.f32 %v336, %v372
    %v379 = vadd.f32 %v337, %v373
    %v380 = vadd.f32 %v374, %v356
    %v381 = vadd.f32 %v375, %v357
    %v382 = vadd.f32 %v376, %v358
    %v383 = vadd.f32 %v377, %v359
    %v384 = vadd.f32 %v378, %v360
    %v385 = vadd.f32 %v379, %v361
    %v386 = vmul.f32 %v362, 2.0
    %v387 = vmul.f32 %v363, 2.0
    %v388 = vmul.f32 %v364, 2.0
    %v389 = vmul.f32 %v365, 2.0
    %v390 = vmul.f32 %v366, 2.0
    %v391 = vmul.f32 %v367, 2.0
    %v398 = vrot.slane %v386, 1
    %v399 = vrot.slane %v387, 1
    %v400 = vsel %vm202, %v398, %v399
    %v401 = vrot.slane %v388, 1
    %v402 = vsel %vm202, %v399, %v401
    %v403 = vrot.slane %v389, 1
    %v404 = vrot.slane %v390, 1
    %v405 = vsel %vm202, %v403, %v404
    %v406 = vrot.slane %v391, 1
    %v407 = vsel %vm202, %v404, %v406
    %v412 = vadd.f32 %v362, %v400
    %v413 = vadd.f32 %v363, %v402
    %v414 = vadd.f32 %v365, %v405
    %v415 = vadd.f32 %v366, %v407
    %v422 = vrot.slane %v362, 2
    %v423 = vrot.slane %v363, 2
    %v424 = vsel %vm227, %v422, %v423
    %v425 = vrot.slane %v364, 2
    %v426 = vsel %vm227, %v423, %v425
    %v427 = vrot.slane %v365, 2
    %v428 = vrot.slane %v366, 2
    %v429 = vsel %vm227, %v427, %v428
    %v430 = vrot.slane %v367, 2
    %v431 = vsel %vm227, %v428, %v430
    %v436 = vadd.f32 %v412, %v424
    %v437 = vadd.f32 %v413, %v426
    %v438 = vadd.f32 %v414, %v429
    %v439 = vadd.f32 %v415, %v431
    %v446 = vrot.slane %v380, 2
    %v447 = vrot.slane %v381, 2
    %v448 = vsel %vm227, %v446, %v447
    %v449 = vrot.slane %v382, 2
    %v450 = vsel %vm227, %v447, %v449
    %v451 = vrot.slane %v383, 2
    %v452 = vrot.slane %v384, 2
    %v453 = vsel %vm227, %v451, %v452
    %v454 = vrot.slane %v385, 2
    %v455 = vsel %vm227, %v452, %v454
    %v460 = vsub.f32 %v380, %v448
    %v461 = vsub.f32 %v381, %v450
    %v462 = vsub.f32 %v383, %v453
    %v463 = vsub.f32 %v384, %v455
    %v464 = vmul.f32 %v436, %v436
    %v465 = vmul.f32 %v437, %v437
    %v466 = vmul.f32 %v438, %v438
    %v467 = vmul.f32 %v439, %v439
    %v468 = vmul.f32 %v460, %v460
    %v469 = vmul.f32 %v461, %v461
    %v470 = vmul.f32 %v462, %v462
    %v471 = vmul.f32 %v463, %v463
    %v472 = vadd.f32 %v464, %v468
    %v473 = vadd.f32 %v465, %v469
    %v474 = vadd.f32 %v466, %v470
    %v475 = vadd.f32 %v467, %v471
    %v476 = vrsqrt.pop %v472
    %v477 = vmul.f32 %v472, %v476
    %vm478 = vcmp.eq.f32.partialorder %v472, inf
    %v479 = vsel %vm478, %v472, %v477
    %vm480 = vcmp.eq.f32.partialorder %v472, 0.0
    %v481 = vand.u32 %v472, 2147483648
    %v482 = vsel %vm480, %v481, %v479
    %v483 = vrsqrt.pop %v473
    %v484 = vmul.f32 %v473, %v483
    %vm485 = vcmp.eq.f32.partialorder %v473, inf
    %v486 = vsel %vm485, %v473, %v484
    %vm487 = vcmp.eq.f32.partialorder %v473, 0.0
    %v488 = vand.u32 %v473, 2147483648
    %v489 = vsel %vm487, %v488, %v486
    %v490 = vrsqrt.pop %v474
    %v491 = vmul.f32 %v474, %v490
    %vm492 = vcmp.eq.f32.partialorder %v474, inf
    %v493 = vsel %vm492, %v474, %v491
    %vm494 = vcmp.eq.f32.partialorder %v474, 0.0
    %v495 = vand.u32 %v474, 2147483648
    %v496 = vsel %vm494, %v495, %v493
    %v497 = vrsqrt.pop %v475
    %v498 = vmul.f32 %v475, %v497
    %vm499 = vcmp.eq.f32.partialorder %v475, inf
    %v500 = vsel %vm499, %v475, %v498
    %vm501 = vcmp.eq.f32.partialorder %v475, 0.0
    %v502 = vand.u32 %v475, 2147483648
    %v503 = vsel %vm501, %v502, %v500
    %v504 = vsub.f32 %v288, %v482
    %v505 = vsub.f32 %v295, %v489
    %v506 = vsub.f32 %v302, %v496
    %v507 = vsub.f32 %v309, %v503
    %v508 = vand.u32 2147483647, %v504
    %v509 = vand.u32 2147483647, %v505
    %v510 = vand.u32 2147483647, %v506
    %v511 = vand.u32 2147483647, %v507
    %vm512 = vcmask 130048
    %v513 = vsel %vm512, %v508, 0.0
    %v514 = vsel %vm512, %v509, 0.0
    %v515 = vadd.f32 %v513, %v514
    %v516 = vsel %vm512, %v510, 0.0
    %v517 = vadd.f32 %v515, %v516
    %v518 = vsel %vm512, %v511, 0.0
    %v519 = vadd.f32 %v517, %v518
    %520 = vadd.xlane.f32.xlu0 %v519
    %v521 = vpop.xlane.xlu0 %520
    %v522 = vrot.slane %v521, 4
    %v523 = vadd.f32 %v521, %v522
    %v524 = vrot.slane %v523, 2
    %v525 = vadd.f32 %v523, %v524
    %v526 = vrot.slane %v525, 1
    %v527 = vadd.f32 %v525, %v526
    %s528 = vtos %v527
    %v529 = vstv %s528
    %vm530 = vcmask 0
    %531 = vst.msk [vmem:[#allocation8] sm:$0x1] %vm530, %v529
    // Predicated region
    $region30: #{tpu_custom_call.1} parent=1 // pred_check
      _
    $region31: #{tpu_custom_call.1} parent=1 // pred_check_branch
      %533 = sbr.rel (0) target = $region33
    $region32: #{tpu_custom_call.1} parent=1 // pred_region
      %s535 = ssub.s32 16, 16
      %536 = vsyncadd [#allocation4], %s535
      %s538 = sshll.u32 [#allocation8], 4
      %s539 = int_to_ptr.vmem [resolvable:$true] %s538
      %541 = dma.vmem_to_hbm [thread:$0]  %s539, 16, %s4, [#allocation4]
    $region33: #{tpu_custom_call.1} parent=1 // pred_fallthru
      _
    // Predicated region
    $region34: #{tpu_custom_call.1} parent=1 // pred_check
      _
    $region35: #{tpu_custom_call.1} parent=1 // pred_check_branch
      %543 = sbr.rel (0) target = $region37
    $region36: #{tpu_custom_call.1} parent=1 // pred_region
      %544 = dma.done [#allocation4], 16
    $region37: #{tpu_custom_call.1} parent=1 // pred_fallthru
      _
    %545 = vsyncpa [#allocation3], 1
    %546 = vsyncpa [#allocation6], 1
    %547 = vsyncpa [#allocation4], 1

</llo_original>
